<compile_context>
chip_gen: v6e
topology: v6e:2x2x1
jax: 0.10.0
libtpu: 0.0.40
codegen_flags: <defaults>
</compile_context>

<pallas_src>
import functools

import jax
import jax.numpy as jnp
from jax import lax
from jax.experimental import pallas as pl
from jax.experimental.pallas import tpu as pltpu

_LANE = 128


def _drl_kernel(x_ref, wl_ref, wc_ref, wr_ref, bd_ref, w11_ref, b1_ref, o_ref,
                *, d, t_valid, mxu_dtype):
    # x_ref block: (1, C, Tp); lanes [t_valid, Tp) are out-of-bounds (unspecified) data.
    x = x_ref[0]                                   # (C, Tp) f32
    C, Tp = x.shape
    lane = lax.broadcasted_iota(jnp.int32, (C, Tp), 1)

    # Zero the OOB tail so no garbage feeds the MXU / residual path (one VPU select).
    x = jnp.where(lane < t_valid, x, 0.0)

    # Dilated-conv taps via XLU lane rotation; mask the wrapped first/last d columns so the
    # result matches Conv1d zero-padding exactly (no wrapper pad / +d slack needed).
    xl = jnp.where(lane >= d, pltpu.roll(x, d % Tp, 1), 0.0)              # col t <- x[t - d]
    xr = jnp.where(lane < t_valid - d, pltpu.roll(x, (-d) % Tp, 1), 0.0)  # col t <- x[t + d]
    xc = x

    if mxu_dtype is not None:
        xl = xl.astype(mxu_dtype)
        xc = xc.astype(mxu_dtype)
        xr = xr.astype(mxu_dtype)

    # Dilated Conv1d(k=3): three K=C MXU matmuls accumulated in f32 (no (3C, Tp) concat buffer).
    h = jnp.dot(wc_ref[...], xc, preferred_element_type=jnp.float32)
    h = h + jnp.dot(wl_ref[...], xl, preferred_element_type=jnp.float32)
    h = h + jnp.dot(wr_ref[...], xr, preferred_element_type=jnp.float32)
    h = h + bd_ref[...]

    # F.leaky_relu default negative_slope = 0.01 (f32 on the VPU).
    h = jnp.maximum(h, 0.01 * h)

    # 1x1 conv == channel matmul + bias.
    if mxu_dtype is not None:
        h = h.astype(mxu_dtype)
    out = jnp.dot(w11_ref[...], h, preferred_element_type=jnp.float32) + b1_ref[...]

    # TODO(synk): nn.Dropout() is identity in eval mode; training-mode random masking
    #             (pltpu.prng_seed / prng_random_bits) is not implemented here.

    # Residual add (module semantics require in_channels == out_channels).
    o_ref[0] = (x + out).astype(o_ref.dtype)


@functools.partial(jax.jit, static_argnames=("dilation", "mxu_dtype"))
def dilated_residual_layer(x, w_dil, b_dil, w_1x1, b_1x1, *, dilation, mxu_dtype=None):
    """x: (N, C, T) f32. w_dil: (Co, Ci, 3), b_dil: (Co,), w_1x1: (Co, Co, 1), b_1x1: (Co,)."""
    N, C, T = x.shape
    Co, Ci, K = w_dil.shape
    assert K == 3 and Ci == C and Co == C, "residual add requires in_channels == out_channels"
    d = int(dilation)

    # Lane-aligned block width; NOT materialized in HBM (partial boundary block handled by Pallas).
    Tp = pl.cdiv(T, _LANE) * _LANE

    # Split the 3 kernel taps into separate (Co, C) weights; 1x1 weight; column biases.
    wl = w_dil[:, :, 0]
    wc = w_dil[:, :, 1]
    wr = w_dil[:, :, 2]
    w11 = w_1x1[:, :, 0]
    bd = b_dil.reshape(Co, 1)
    b1 = b_1x1.reshape(Co, 1)
    if mxu_dtype is not None:
        wl, wc, wr, w11 = (a.astype(mxu_dtype) for a in (wl, wc, wr, w11))

    # Per-step VMEM footprint: double-buffered in/out blocks + in-kernel temporaries + weights.
    plane = C * Tp * 4
    vmem_need = (2 * 2 * plane) + 8 * plane + (3 * Co * C + Co * Co + 2 * Co) * 4 + (1 << 20)
    vmem_limit = int(min(max(vmem_need, 32 << 20), 128 << 20))

    kernel = functools.partial(_drl_kernel, d=d, t_valid=T, mxu_dtype=mxu_dtype)
    full2d = lambda n: (0, 0)

    y = pl.pallas_call(
        kernel,
        out_shape=jax.ShapeDtypeStruct((N, Co, T), x.dtype),
        grid_spec=pltpu.PrefetchScalarGridSpec(
            num_scalar_prefetch=0,
            grid=(N,),
            in_specs=[
                pl.BlockSpec((1, C, Tp), lambda n: (n, 0, 0)),   # one batch row per step
                pl.BlockSpec((Co, C), full2d),                   # left-tap weight
                pl.BlockSpec((Co, C), full2d),                   # center-tap weight
                pl.BlockSpec((Co, C), full2d),                   # right-tap weight
                pl.BlockSpec((Co, 1), full2d),                   # dilated-conv bias
                pl.BlockSpec((Co, Co), full2d),                  # 1x1 conv weight
                pl.BlockSpec((Co, 1), full2d),                   # 1x1 conv bias
            ],
            out_specs=pl.BlockSpec((1, Co, Tp), lambda n: (n, 0, 0)),
        ),
        compiler_params=pltpu.CompilerParams(
            dimension_semantics=("parallel",),
            vmem_limit_bytes=vmem_limit,
        ),
    )(x, wl, wc, wr, bd, w11, b1)

    return y


def _reference(x, w_dil, b_dil, w_1x1, b_1x1, dilation):
    # Pure-JAX reference (NCW layout), eval-mode dropout (identity).
    dn = ("NCH", "OIH", "NCH")
    h = lax.conv_general_dilated(
        x, w_dil, window_strides=(1,), padding=[(dilation, dilation)],
        rhs_dilation=(dilation,), dimension_numbers=dn)
    h = h + b_dil[None, :, None]
    h = jnp.where(h > 0, h, 0.01 * h)
    o = lax.conv_general_dilated(
        h, w_1x1, window_strides=(1,), padding=[(0, 0)], dimension_numbers=dn)
    o = o + b_1x1[None, :, None]
    return x + o


if __name__ == "__main__":
    N, C, T = 2, 16, 160   # T deliberately NOT a multiple of 128 (ragged boundary block)
    dilation = 4

    key = jax.random.PRNGKey(0)
    k1, k2, k3, k4, k5 = jax.random.split(key, 5)

    x = jax.random.normal(k1, (N, C, T), dtype=jnp.float32)
    # Shapes from nn.Conv1d(C, C, 3, padding=dilation, dilation=dilation) and nn.Conv1d(C, C, 1).
    w_dil = jax.random.normal(k2, (C, C, 3), dtype=jnp.float32) * 0.1
    b_dil = jax.random.normal(k3, (C,), dtype=jnp.float32) * 0.1
    w_1x1 = jax.random.normal(k4, (C, C, 1), dtype=jnp.float32) * 0.1
    b_1x1 = jax.random.normal(k5, (C,), dtype=jnp.float32) * 0.1

    y = dilated_residual_layer(x, w_dil, b_dil, w_1x1, b_1x1, dilation=dilation)
    y = jax.block_until_ready(y)

    y_ref = _reference(x, w_dil, b_dil, w_1x1, b_1x1, dilation)
    assert y.shape == y_ref.shape, (y.shape, y_ref.shape)
    assert jnp.allclose(y, y_ref, atol=1e-4, rtol=1e-4), "Pallas kernel mismatch vs reference"

    print("KERNEL_OK")
</pallas_src>

<mosaic_0001>
module attributes {stable_mosaic.version = 11 : i64} {
  func.func @_drl_kernel(%arg0: i32, %arg1: memref<1x16x256xf32, #tpu.memory_space<vmem>>, %arg2: memref<16x16xf32, #tpu.memory_space<vmem>>, %arg3: memref<16x16xf32, #tpu.memory_space<vmem>>, %arg4: memref<16x16xf32, #tpu.memory_space<vmem>>, %arg5: memref<16x1xf32, #tpu.memory_space<vmem>>, %arg6: memref<16x16xf32, #tpu.memory_space<vmem>>, %arg7: memref<16x1xf32, #tpu.memory_space<vmem>>, %arg8: memref<1x16x256xf32, #tpu.memory_space<vmem>>) attributes {dimension_semantics = [#tpu.dimension_semantics<parallel>], iteration_bounds = array<i64: 2>, scalar_prefetch = 0 : i64, scratch_operands = 0 : i64, tpu.core_type = #tpu.core_type<tc>, window_params = [{transform_indices = @transform_0, window_bounds = array<i64: 1, 16, 256>}, {pipeline_mode = #tpu.pipeline_mode<synchronous>, transform_indices = @transform_1, window_bounds = array<i64: 16, 16>}, {pipeline_mode = #tpu.pipeline_mode<synchronous>, transform_indices = @transform_2, window_bounds = array<i64: 16, 16>}, {pipeline_mode = #tpu.pipeline_mode<synchronous>, transform_indices = @transform_3, window_bounds = array<i64: 16, 16>}, {pipeline_mode = #tpu.pipeline_mode<synchronous>, transform_indices = @transform_4, window_bounds = array<i64: 16, 1>}, {pipeline_mode = #tpu.pipeline_mode<synchronous>, transform_indices = @transform_5, window_bounds = array<i64: 16, 16>}, {pipeline_mode = #tpu.pipeline_mode<synchronous>, transform_indices = @transform_6, window_bounds = array<i64: 16, 1>}, {transform_indices = @transform_7, window_bounds = array<i64: 1, 16, 256>}]} {
    %c0 = arith.constant 0 : index
    %c0_0 = arith.constant 0 : index
    %c0_1 = arith.constant 0 : index
    %0 = vector.load %arg1[%c0, %c0_0, %c0_1] : memref<1x16x256xf32, #tpu.memory_space<vmem>>, vector<1x16x256xf32>
    %1 = vector.shape_cast %0 : vector<1x16x256xf32> to vector<16x256xf32>
    %2 = tpu.iota {dimensions = array<i32: 1>} : vector<16x256xi32>
    %c160_i32 = arith.constant 160 : i32
    %3 = vector.broadcast %c160_i32 : i32 to vector<16x256xi32>
    %4 = arith.cmpi slt, %2, %3 : vector<16x256xi32>
    %cst = arith.constant 0.000000e+00 : f32
    %5 = vector.broadcast %cst : f32 to vector<16x256xf32>
    %6 = arith.select %4, %1, %5 : vector<16x256xi1>, vector<16x256xf32>
    %c4_i32 = arith.constant 4 : i32
    %7 = vector.broadcast %c4_i32 : i32 to vector<16x256xi32>
    %8 = arith.cmpi sge, %2, %7 : vector<16x256xi32>
    %c4_i32_2 = arith.constant 4 : i32
    %9 = tpu.dynamic_rotate %6 by %c4_i32_2 dim 1 : vector<16x256xf32>, i32 -> vector<16x256xf32>
    %cst_3 = arith.constant 0.000000e+00 : f32
    %10 = vector.broadcast %cst_3 : f32 to vector<16x256xf32>
    %11 = arith.select %8, %9, %10 : vector<16x256xi1>, vector<16x256xf32>
    %c156_i32 = arith.constant 156 : i32
    %12 = vector.broadcast %c156_i32 : i32 to vector<16x256xi32>
    %13 = arith.cmpi slt, %2, %12 : vector<16x256xi32>
    %c252_i32 = arith.constant 252 : i32
    %14 = tpu.dynamic_rotate %6 by %c252_i32 dim 1 : vector<16x256xf32>, i32 -> vector<16x256xf32>
    %cst_4 = arith.constant 0.000000e+00 : f32
    %15 = vector.broadcast %cst_4 : f32 to vector<16x256xf32>
    %16 = arith.select %13, %14, %15 : vector<16x256xi1>, vector<16x256xf32>
    %c0_5 = arith.constant 0 : index
    %c0_6 = arith.constant 0 : index
    %17 = vector.load %arg3[%c0_5, %c0_6] : memref<16x16xf32, #tpu.memory_space<vmem>>, vector<16x16xf32>
    %cst_7 = arith.constant dense<0.000000e+00> : vector<16x256xf32>
    %18 = tpu.matmul %17, %6, %cst_7 {dimension_numbers = #tpu.dot_dimension_numbers<[1], [0], [0], [1], [0, 0, 1, 1], [], []>} : vector<16x16xf32>, vector<16x256xf32>, vector<16x256xf32> -> vector<16x256xf32>
    %c0_8 = arith.constant 0 : index
    %c0_9 = arith.constant 0 : index
    %19 = vector.load %arg2[%c0_8, %c0_9] : memref<16x16xf32, #tpu.memory_space<vmem>>, vector<16x16xf32>
    %cst_10 = arith.constant dense<0.000000e+00> : vector<16x256xf32>
    %20 = tpu.matmul %19, %11, %cst_10 {dimension_numbers = #tpu.dot_dimension_numbers<[1], [0], [0], [1], [0, 0, 1, 1], [], []>} : vector<16x16xf32>, vector<16x256xf32>, vector<16x256xf32> -> vector<16x256xf32>
    %21 = arith.addf %18, %20 : vector<16x256xf32>
    %c0_11 = arith.constant 0 : index
    %c0_12 = arith.constant 0 : index
    %22 = vector.load %arg4[%c0_11, %c0_12] : memref<16x16xf32, #tpu.memory_space<vmem>>, vector<16x16xf32>
    %cst_13 = arith.constant dense<0.000000e+00> : vector<16x256xf32>
    %23 = tpu.matmul %22, %16, %cst_13 {dimension_numbers = #tpu.dot_dimension_numbers<[1], [0], [0], [1], [0, 0, 1, 1], [], []>} : vector<16x16xf32>, vector<16x256xf32>, vector<16x256xf32> -> vector<16x256xf32>
    %24 = arith.addf %21, %23 : vector<16x256xf32>
    %c0_14 = arith.constant 0 : index
    %c0_15 = arith.constant 0 : index
    %25 = vector.load %arg5[%c0_14, %c0_15] : memref<16x1xf32, #tpu.memory_space<vmem>>, vector<16x1xf32>
    %26 = vector.broadcast %25 : vector<16x1xf32> to vector<16x256xf32>
    %27 = arith.addf %24, %26 : vector<16x256xf32>
    %cst_16 = arith.constant 0.00999999977 : f32
    %28 = vector.broadcast %cst_16 : f32 to vector<16x256xf32>
    %29 = arith.mulf %28, %27 : vector<16x256xf32>
    %30 = arith.maximumf %27, %29 : vector<16x256xf32>
    %c0_17 = arith.constant 0 : index
    %c0_18 = arith.constant 0 : index
    %31 = vector.load %arg6[%c0_17, %c0_18] : memref<16x16xf32, #tpu.memory_space<vmem>>, vector<16x16xf32>
    %cst_19 = arith.constant dense<0.000000e+00> : vector<16x256xf32>
    %32 = tpu.matmul %31, %30, %cst_19 {dimension_numbers = #tpu.dot_dimension_numbers<[1], [0], [0], [1], [0, 0, 1, 1], [], []>} : vector<16x16xf32>, vector<16x256xf32>, vector<16x256xf32> -> vector<16x256xf32>
    %c0_20 = arith.constant 0 : index
    %c0_21 = arith.constant 0 : index
    %33 = vector.load %arg7[%c0_20, %c0_21] : memref<16x1xf32, #tpu.memory_space<vmem>>, vector<16x1xf32>
    %34 = vector.broadcast %33 : vector<16x1xf32> to vector<16x256xf32>
    %35 = arith.addf %32, %34 : vector<16x256xf32>
    %36 = arith.addf %6, %35 : vector<16x256xf32>
    %c0_22 = arith.constant 0 : index
    %c0_23 = arith.constant 0 : index
    %c0_24 = arith.constant 0 : index
    %37 = vector.load %arg8[%c0_22, %c0_23, %c0_24] : memref<1x16x256xf32, #tpu.memory_space<vmem>>, vector<1x16x256xf32>
    %38 = vector.shape_cast %37 : vector<1x16x256xf32> to vector<16x256xf32>
    %39 = vector.shape_cast %36 : vector<16x256xf32> to vector<1x16x256xf32>
    tpu.vector_store %arg8[%c0_22, %c0_23, %c0_24], %39 {strides = array<i32>} : memref<1x16x256xf32, #tpu.memory_space<vmem>>, vector<1x16x256xf32>,
    return
  }
  func.func @transform_0(%arg0: i32) -> (i32, i32, i32) {
    %c0_i32 = arith.constant 0 : i32
    %c0_i32_0 = arith.constant 0 : i32
    %c0_i32_1 = arith.constant 0 : i32
    return %arg0, %c0_i32, %c0_i32_0 : i32, i32, i32
  }
  func.func @transform_1(%arg0: i32) -> (i32, i32) {
    %c0_i32 = arith.constant 0 : i32
    %c0_i32_0 = arith.constant 0 : i32
    %c0_i32_1 = arith.constant 0 : i32
    return %c0_i32, %c0_i32_0 : i32, i32
  }
  func.func @transform_2(%arg0: i32) -> (i32, i32) {
    %c0_i32 = arith.constant 0 : i32
    %c0_i32_0 = arith.constant 0 : i32
    %c0_i32_1 = arith.constant 0 : i32
    return %c0_i32, %c0_i32_0 : i32, i32
  }
  func.func @transform_3(%arg0: i32) -> (i32, i32) {
    %c0_i32 = arith.constant 0 : i32
    %c0_i32_0 = arith.constant 0 : i32
    %c0_i32_1 = arith.constant 0 : i32
    return %c0_i32, %c0_i32_0 : i32, i32
  }
  func.func @transform_4(%arg0: i32) -> (i32, i32) {
    %c0_i32 = arith.constant 0 : i32
    %c0_i32_0 = arith.constant 0 : i32
    %c0_i32_1 = arith.constant 0 : i32
    return %c0_i32, %c0_i32_0 : i32, i32
  }
  func.func @transform_5(%arg0: i32) -> (i32, i32) {
    %c0_i32 = arith.constant 0 : i32
    %c0_i32_0 = arith.constant 0 : i32
    %c0_i32_1 = arith.constant 0 : i32
    return %c0_i32, %c0_i32_0 : i32, i32
  }
  func.func @transform_6(%arg0: i32) -> (i32, i32) {
    %c0_i32 = arith.constant 0 : i32
    %c0_i32_0 = arith.constant 0 : i32
    %c0_i32_1 = arith.constant 0 : i32
    return %c0_i32, %c0_i32_0 : i32, i32
  }
  func.func @transform_7(%arg0: i32) -> (i32, i32, i32) {
    %c0_i32 = arith.constant 0 : i32
    %c0_i32_0 = arith.constant 0 : i32
    %c0_i32_1 = arith.constant 0 : i32
    return %arg0, %c0_i32, %c0_i32_0 : i32, i32, i32
  }
}

</mosaic_0001>

<llo_original>
// kernel: dilated_residual_layer.1
$region0: #{dilated_residual_layer.1}
  #allocation0 [shape = 'u32[]', space=smem, size = 0x4, offset = 0x4, fixed_abs, tag = 'smem constant byte address 0x4 - core index']
  #allocation1 [shape = 'u32[144,128]{1,0:T(1,128)}', space=vmem, size = 0x12000, scoped, tag = 'internal scratch']
  %s0 = inlined_call_operand.vmem [shape: f32[2,16,160], index: 0, kind: input, shape index: {}]
  %s1 = inlined_call_operand.vmem [shape: f32[16,16], index: 1, kind: input, shape index: {}]
  %s2 = inlined_call_operand.vmem [shape: f32[16,16], index: 2, kind: input, shape index: {}]
  %s3 = inlined_call_operand.vmem [shape: f32[16,16], index: 3, kind: input, shape index: {}]
  %s4 = inlined_call_operand.vmem [shape: f32[16,1], index: 4, kind: input, shape index: {}]
  %s5 = inlined_call_operand.vmem [shape: f32[16,16], index: 5, kind: input, shape index: {}]
  %s6 = inlined_call_operand.vmem [shape: f32[16,1], index: 6, kind: input, shape index: {}]
  %s7 = inlined_call_operand.hbm [shape: f32[2,16,160], index: 7, kind: output, shape index: {}]
  %s8 = sld [smem:[#allocation0]]
  $region61: #{dilated_residual_layer.1} parent=0
    _
  %s10 = ssub.s32 1, %s8
  %s11 = scalar_select 0, %s10, %s8
  $region1: #{dilated_residual_layer.1} parent=0
    #allocation2 [shape = 'u8[32768]{0}', space=vmem, size = 0x8000, scoped, tag = 'output window, operand 0']
    #allocation3 [shape = 's32[2]{0}', space=sflag, size = 0x8, scoped, tag = 'scoped memory for dilated_residual_layer.1']
    %12 = vsyncpa [#allocation3], 0
    %s13 = scalar_lea.sflag [#allocation3], 1
    %14 = vsyncpa %s13, 0
    loop: start=0, step=1, limit=4
    $region2: #{dilated_residual_layer.1} parent=1 // loop_pre_header
      _
    $region3: #{dilated_residual_layer.1} parent=1 // loop_header
      %s16 = sphi 0, %s20
      %p17 = scmp.ge.s32.totalorder %s16, 4
      %s26 = sphi 0, %s28
      %s29 = sphi 0, %s26
      %s30 = sphi 0, %s29
      %s46 = sphi 0, %s30
      %s50 = sphi 0, %s50
      %s52 = sphi 0, %s50
      %s53 = sphi 0, %s52
      %s67 = sphi 0, %s53
      %s71 = sphi 0, %s71
      %s73 = sphi 0, %s71
      %s74 = sphi 0, %s73
      %s88 = sphi 0, %s74
      %s92 = sphi 0, %s92
      %s94 = sphi 0, %s92
      %s95 = sphi 0, %s94
      %s109 = sphi 0, %s95
      %s113 = sphi 0, %s113
      %s115 = sphi 0, %s113
      %s116 = sphi 0, %s115
      %s130 = sphi 0, %s116
      %s134 = sphi 0, %s134
      %s136 = sphi 0, %s134
      %s137 = sphi 0, %s136
      %s151 = sphi 0, %s137
      %s155 = sphi 0, %s155
      %s157 = sphi 0, %s155
      %s158 = sphi 0, %s157
      %s172 = sphi 0, %s158
      %s178 = sphi 0, %s180
      %s181 = sphi 0, %s178
      %s182 = sphi 0, %s181
      %s198 = sphi 0, %s182
    $region4: #{dilated_residual_layer.1} parent=1 // loop_header_branch
      %19 = sbr.rel (%p17) target = $region8
    $region5: #{dilated_residual_layer.1} parent=1 // loop_body
      %s21 = ssub.s32 %s16, 1
      %s22 = ssub.s32 %s16, 2
      %s23 = sadd.s32 %s16, 1
      %s24 = ssub.s32 %s16, %s23
      %p25 = scmp.eq.s32.totalorder %s24, 0
      %s27 = sadd.s32 %s26, 1
      %s28 = scalar_select %p25, %s26, %s27
      %p31 = pneg %p25
      %p32 = scmp.eq.s32.totalorder %s16, 1
      %p33 = por %p31, %p32
      %p34 = scmp.ne.s32.totalorder %s26, %s29
      %p35 = scmp.eq.s32.totalorder %s16, 0
      %p36 = por %p34, %p35
      %p37 = scmp.ne.s32.totalorder %s26, %s29
      %p38 = scmp.eq.s32.totalorder %s21, 1
      %p39 = por %p37, %p38
      %p40 = scmp.ne.s32.totalorder %s29, %s30
      %p41 = scmp.eq.s32.totalorder %s21, 0
      %p42 = por %p40, %p41
      %p43 = scmp.ne.s32.totalorder %s29, %s30
      %p44 = scmp.eq.s32.totalorder %s22, 1
      %p45 = por %p43, %p44
      %p47 = scmp.ne.s32.totalorder %s30, %s46
      %p48 = scmp.eq.s32.totalorder %s22, 0
      %p49 = por %p47, %p48
      %s51 = sadd.s32 %s50, 1
      %p54 = scmp.eq.s32.totalorder %s16, 1
      %p55 = scmp.ne.s32.totalorder %s50, %s52
      %p56 = scmp.eq.s32.totalorder %s16, 0
      %p57 = por %p55, %p56
      %p58 = scmp.ne.s32.totalorder %s50, %s52
      %p59 = scmp.eq.s32.totalorder %s21, 1
      %p60 = por %p58, %p59
      %p61 = scmp.ne.s32.totalorder %s52, %s53
      %p62 = scmp.eq.s32.totalorder %s21, 0
      %p63 = por %p61, %p62
      %p64 = scmp.ne.s32.totalorder %s52, %s53
      %p65 = scmp.eq.s32.totalorder %s22, 1
      %p66 = por %p64, %p65
      %p68 = scmp.ne.s32.totalorder %s53, %s67
      %p69 = scmp.eq.s32.totalorder %s22, 0
      %p70 = por %p68, %p69
      %s72 = sadd.s32 %s71, 1
      %p75 = scmp.eq.s32.totalorder %s16, 1
      %p76 = scmp.ne.s32.totalorder %s71, %s73
      %p77 = scmp.eq.s32.totalorder %s16, 0
      %p78 = por %p76, %p77
      %p79 = scmp.ne.s32.totalorder %s71, %s73
      %p80 = scmp.eq.s32.totalorder %s21, 1
      %p81 = por %p79, %p80
      %p82 = scmp.ne.s32.totalorder %s73, %s74
      %p83 = scmp.eq.s32.totalorder %s21, 0
      %p84 = por %p82, %p83
      %p85 = scmp.ne.s32.totalorder %s73, %s74
      %p86 = scmp.eq.s32.totalorder %s22, 1
      %p87 = por %p85, %p86
      %p89 = scmp.ne.s32.totalorder %s74, %s88
      %p90 = scmp.eq.s32.totalorder %s22, 0
      %p91 = por %p89, %p90
      %s93 = sadd.s32 %s92, 1
      %p96 = scmp.eq.s32.totalorder %s16, 1
      %p97 = scmp.ne.s32.totalorder %s92, %s94
      %p98 = scmp.eq.s32.totalorder %s16, 0
      %p99 = por %p97, %p98
      %p100 = scmp.ne.s32.totalorder %s92, %s94
      %p101 = scmp.eq.s32.totalorder %s21, 1
      %p102 = por %p100, %p101
      %p103 = scmp.ne.s32.totalorder %s94, %s95
      %p104 = scmp.eq.s32.totalorder %s21, 0
      %p105 = por %p103, %p104
      %p106 = scmp.ne.s32.totalorder %s94, %s95
      %p107 = scmp.eq.s32.totalorder %s22, 1
      %p108 = por %p106, %p107
      %p110 = scmp.ne.s32.totalorder %s95, %s109
      %p111 = scmp.eq.s32.totalorder %s22, 0
      %p112 = por %p110, %p111
      %s114 = sadd.s32 %s113, 1
      %p117 = scmp.eq.s32.totalorder %s16, 1
      %p118 = scmp.ne.s32.totalorder %s113, %s115
      %p119 = scmp.eq.s32.totalorder %s16, 0
      %p120 = por %p118, %p119
      %p121 = scmp.ne.s32.totalorder %s113, %s115
      %p122 = scmp.eq.s32.totalorder %s21, 1
      %p123 = por %p121, %p122
      %p124 = scmp.ne.s32.totalorder %s115, %s116
      %p125 = scmp.eq.s32.totalorder %s21, 0
      %p126 = por %p124, %p125
      %p127 = scmp.ne.s32.totalorder %s115, %s116
      %p128 = scmp.eq.s32.totalorder %s22, 1
      %p129 = por %p127, %p128
      %p131 = scmp.ne.s32.totalorder %s116, %s130
      %p132 = scmp.eq.s32.totalorder %s22, 0
      %p133 = por %p131, %p132
      %s135 = sadd.s32 %s134, 1
      %p138 = scmp.eq.s32.totalorder %s16, 1
      %p139 = scmp.ne.s32.totalorder %s134, %s136
      %p140 = scmp.eq.s32.totalorder %s16, 0
      %p141 = por %p139, %p140
      %p142 = scmp.ne.s32.totalorder %s134, %s136
      %p143 = scmp.eq.s32.totalorder %s21, 1
      %p144 = por %p142, %p143
      %p145 = scmp.ne.s32.totalorder %s136, %s137
      %p146 = scmp.eq.s32.totalorder %s21, 0
      %p147 = por %p145, %p146
      %p148 = scmp.ne.s32.totalorder %s136, %s137
      %p149 = scmp.eq.s32.totalorder %s22, 1
      %p150 = por %p148, %p149
      %p152 = scmp.ne.s32.totalorder %s137, %s151
      %p153 = scmp.eq.s32.totalorder %s22, 0
      %p154 = por %p152, %p153
      %s156 = sadd.s32 %s155, 1
      %p159 = scmp.eq.s32.totalorder %s16, 1
      %p160 = scmp.ne.s32.totalorder %s155, %s157
      %p161 = scmp.eq.s32.totalorder %s16, 0
      %p162 = por %p160, %p161
      %p163 = scmp.ne.s32.totalorder %s155, %s157
      %p164 = scmp.eq.s32.totalorder %s21, 1
      %p165 = por %p163, %p164
      %p166 = scmp.ne.s32.totalorder %s157, %s158
      %p167 = scmp.eq.s32.totalorder %s21, 0
      %p168 = por %p166, %p167
      %p169 = scmp.ne.s32.totalorder %s157, %s158
      %p170 = scmp.eq.s32.totalorder %s22, 1
      %p171 = por %p169, %p170
      %p173 = scmp.ne.s32.totalorder %s158, %s172
      %p174 = scmp.eq.s32.totalorder %s22, 0
      %p175 = por %p173, %p174
      %s176 = ssub.s32 %s16, %s23
      %p177 = scmp.eq.s32.totalorder %s176, 0
      %s179 = sadd.s32 %s178, 1
      %s180 = scalar_select %p177, %s178, %s179
      %p183 = pneg %p177
      %p184 = scmp.eq.s32.totalorder %s16, 1
      %p185 = por %p183, %p184
      %p186 = scmp.ne.s32.totalorder %s178, %s181
      %p187 = scmp.eq.s32.totalorder %s16, 0
      %p188 = por %p186, %p187
      %p189 = scmp.ne.s32.totalorder %s178, %s181
      %p190 = scmp.eq.s32.totalorder %s21, 1
      %p191 = por %p189, %p190
      %p192 = scmp.ne.s32.totalorder %s181, %s182
      %p193 = scmp.eq.s32.totalorder %s21, 0
      %p194 = por %p192, %p193
      %p195 = scmp.ne.s32.totalorder %s181, %s182
      %p196 = scmp.eq.s32.totalorder %s22, 1
      %p197 = por %p195, %p196
      %p199 = scmp.ne.s32.totalorder %s182, %s198
      %p200 = scmp.eq.s32.totalorder %s22, 0
      %p201 = por %p199, %p200
      %p202 = scmp.le.s32.totalorder 1, %s16
      %p203 = scmp.lt.s32.totalorder %s16, 3
      %p204 = pnand %p202, %p203
      %p205 = pneg %p204
      // Predicated region
      $region9: #{dilated_residual_layer.1} parent=5 // pred_check
        _
      $region10: #{dilated_residual_layer.1} parent=5 // pred_check_branch
        %207 = sbr.rel (%p204) target = $region12
      $region11: #{dilated_residual_layer.1} parent=5 // pred_region
        %s208 = ssub.s32 %s16, 1
        // Predicated region
        $region13: #{dilated_residual_layer.1} parent=11 // pred_check
          %p209 = pneg %p63
        $region14: #{dilated_residual_layer.1} parent=11 // pred_check_branch
          %211 = sbr.rel (%p209) target = $region16
        $region15: #{dilated_residual_layer.1} parent=11 // pred_region
          _
        $region16: #{dilated_residual_layer.1} parent=11 // pred_fallthru
          _
        // Predicated region
        $region17: #{dilated_residual_layer.1} parent=11 // pred_check
          %p212 = pneg %p84
        $region18: #{dilated_residual_layer.1} parent=11 // pred_check_branch
          %214 = sbr.rel (%p212) target = $region20
        $region19: #{dilated_residual_layer.1} parent=11 // pred_region
          _
        $region20: #{dilated_residual_layer.1} parent=11 // pred_fallthru
          _
        // Predicated region
        $region21: #{dilated_residual_layer.1} parent=11 // pred_check
          %p215 = pneg %p105
        $region22: #{dilated_residual_layer.1} parent=11 // pred_check_branch
          %217 = sbr.rel (%p215) target = $region24
        $region23: #{dilated_residual_layer.1} parent=11 // pred_region
          _
        $region24: #{dilated_residual_layer.1} parent=11 // pred_fallthru
          _
        // Predicated region
        $region25: #{dilated_residual_layer.1} parent=11 // pred_check
          %p218 = pneg %p126
        $region26: #{dilated_residual_layer.1} parent=11 // pred_check_branch
          %220 = sbr.rel (%p218) target = $region28
        $region27: #{dilated_residual_layer.1} parent=11 // pred_region
          _
        $region28: #{dilated_residual_layer.1} parent=11 // pred_fallthru
          _
        // Predicated region
        $region29: #{dilated_residual_layer.1} parent=11 // pred_check
          %p221 = pneg %p147
        $region30: #{dilated_residual_layer.1} parent=11 // pred_check_branch
          %223 = sbr.rel (%p221) target = $region32
        $region31: #{dilated_residual_layer.1} parent=11 // pred_region
          _
        $region32: #{dilated_residual_layer.1} parent=11 // pred_fallthru
          _
        // Predicated region
        $region33: #{dilated_residual_layer.1} parent=11 // pred_check
          %p224 = pneg %p168
        $region34: #{dilated_residual_layer.1} parent=11 // pred_check_branch
          %226 = sbr.rel (%p224) target = $region36
        $region35: #{dilated_residual_layer.1} parent=11 // pred_region
          _
        $region36: #{dilated_residual_layer.1} parent=11 // pred_fallthru
          _
      $region12: #{dilated_residual_layer.1} parent=5 // pred_fallthru
        _
      %p227 = scmp.lt.s32.totalorder %s16, 2
      // Predicated region
      $region37: #{dilated_residual_layer.1} parent=5 // pred_check
        %p228 = pneg %p227
      $region38: #{dilated_residual_layer.1} parent=5 // pred_check_branch
        %230 = sbr.rel (%p228) target = $region40
      $region39: #{dilated_residual_layer.1} parent=5 // pred_region
        // Predicated region
        $region41: #{dilated_residual_layer.1} parent=39 // pred_check
          %p231 = pneg %p36
        $region42: #{dilated_residual_layer.1} parent=39 // pred_check_branch
          %233 = sbr.rel (%p231) target = $region44
        $region43: #{dilated_residual_layer.1} parent=39 // pred_region
          %p234 = scmp.lt.s32.totalorder %s16, 1
          %s235 = scalar_select %p234, %s16, 1
          %s236 = smul.addr %s235, 4
          %s237 = smul.addr %s236, 8
          %s238 = scalar_lea.vmem %s0, %s237
        $region44: #{dilated_residual_layer.1} parent=39 // pred_fallthru
          _
      $region40: #{dilated_residual_layer.1} parent=5 // pred_fallthru
        _
      %p239 = scmp.le.s32.totalorder 1, %s16
      %p240 = scmp.lt.s32.totalorder %s16, 3
      %p241 = pnand %p239, %p240
      %p242 = pneg %p241
      // Predicated region
      $region45: #{dilated_residual_layer.1} parent=5 // pred_check
        _
      $region46: #{dilated_residual_layer.1} parent=5 // pred_check_branch
        %244 = sbr.rel (%p241) target = $region48
      $region47: #{dilated_residual_layer.1} parent=5 // pred_region
        %s245 = ssub.s32 %s16, 1
        %p246 = scmp.lt.s32.totalorder %s21, 1
        %s247 = scalar_select %p246, %s21, 1
        %s248 = smul.addr %s247, 4
        %s249 = smul.addr %s248, 8
        %s250 = scalar_lea.vmem %s0, %s249
        %p251 = pneg %p42
        %p252 = pneg %p39
        %p253 = pneg %p63
        %p254 = pneg %p60
        %p255 = pneg %p84
        %p256 = pneg %p81
        %p257 = pneg %p105
        %p258 = pneg %p102
        %p259 = pneg %p126
        %p260 = pneg %p123
        %p261 = pneg %p147
        %p262 = pneg %p144
        %p263 = pneg %p168
        %p264 = pneg %p165
        %p265 = pneg %p194
        %p266 = pneg %p191
        %s267 = sand.u32 %s181, 1
        %s268 = scalar_lea.sflag [#allocation3], %s267
        %s269 = sand.u32 %s181, 1
        %s270 = smul.addr %s269, 32
        %s271 = scalar_lea.vmem [#allocation2], %s270
        %p272 = scmp.lt.s32.totalorder %s21, 1
        %s273 = scalar_select %p272, %s21, 1
        %s274 = smul.addr %s273, 4
        %s275 = smul.addr %s274, 8
        %s276 = scalar_lea.vmem %s0, %s275
        %v277 = vld [vmem:[%s276] sm:$0xff]
        %v278 = vld [vmem:[%s276 + $0x8] sm:$0xff]
        %v279 = vld [vmem:[%s276 + $0x10] sm:$0xff]
        %v280 = vld [vmem:[%s276 + $0x18] sm:$0xff]
        %v281 = vlaneseq
        %v282 = vand.u32 %v281, 127
        %v283 = vadd.s32 %v282, 128
        %vm284 = vcmp.lt.s32.totalorder %v282, 160
        %vm285 = vcmp.lt.s32.totalorder %v283, 160
        %v286 = vsel %vm284, %v277, 0.0
        %v287 = vsel %vm285, %v278, 0.0
        %v288 = vsel %vm284, %v279, 0.0
        %v289 = vsel %vm285, %v280, 0.0
        %vm290 = vcmp.ge.s32.totalorder %v282, 4
        %vm291 = vcmp.ge.s32.totalorder %v283, 4
        %292 = vrot.lane.b32.xlu0 %v286, 4
        %v293 = vpop.permute.xlu0 %292
        %294 = vrot.lane.b32.xlu0 %v288, 4
        %v295 = vpop.permute.xlu0 %294
        %296 = vrot.lane.b32.xlu0 %v287, 4
        %v297 = vpop.permute.xlu0 %296
        %298 = vrot.lane.b32.xlu0 %v289, 4
        %v299 = vpop.permute.xlu0 %298
        %vm300 = vcmp.lt.s32.totalorder %v282, 4
        %v301 = vsel %vm300, %v293, %v297
        %v302 = vsel %vm300, %v295, %v299
        %v303 = vsel %vm300, %v297, %v293
        %v304 = vsel %vm300, %v299, %v295
        %v305 = vsel %vm290, %v303, 0.0
        %v306 = vsel %vm291, %v301, 0.0
        %v307 = vsel %vm290, %v304, 0.0
        %v308 = vsel %vm291, %v302, 0.0
        %vm309 = vcmp.lt.s32.totalorder %v282, 156
        %vm310 = vcmp.lt.s32.totalorder %v283, 156
        %311 = vrot.lane.b32.xlu0 %v286, 124
        %v312 = vpop.permute.xlu0 %311
        %313 = vrot.lane.b32.xlu0 %v288, 124
        %v314 = vpop.permute.xlu0 %313
        %315 = vrot.lane.b32.xlu0 %v287, 124
        %v316 = vpop.permute.xlu0 %315
        %317 = vrot.lane.b32.xlu0 %v289, 124
        %v318 = vpop.permute.xlu0 %317
        %vm319 = vcmp.lt.s32.totalorder %v282, 124
        %v320 = vsel %vm319, %v312, %v316
        %v321 = vsel %vm319, %v314, %v318
        %v322 = vsel %vm319, %v316, %v312
        %v323 = vsel %vm319, %v318, %v314
        %v324 = vsel %vm309, %v320, 0.0
        %v325 = vsel %vm310, %v322, 0.0
        %v326 = vsel %vm309, %v321, 0.0
        %v327 = vsel %vm310, %v323, 0.0
        %v328 = vld [vmem:[%s2] sm:$0xff]
        %v329 = vld [vmem:[%s2 + $0x8] sm:$0xff]
        %v330 = vld [vmem:[%s1] sm:$0xff]
        %v331 = vld [vmem:[%s1 + $0x8] sm:$0xff]
        %vm332 = vcmask 130048
        %v334 = vsel %vm332, %v330, 0
        %v337 = vsel %vm332, %v331, 0
        %339 = vmatprep.subr.mxu0 0.0
        %340 = vmatpush1.msra.mxu0 0.0
        %341 = vmatprep.subr.mxu0 0.0
        %342 = vmatpush1.msra.mxu0 0.0
        %343 = vmatprep.subr.mxu0 0.0
        %344 = vmatpush1.msra.mxu0 0.0
        %345 = vmatprep.subr.mxu0 0.0
        %346 = vmatpush1.msra.mxu0 0.0
        %347 = vmatprep.subr.mxu0 0.0
        %348 = vmatpush1.msra.mxu0 0.0
        %349 = vmatprep.subr.mxu0 0.0
        %350 = vmatpush1.msra.mxu0 0.0
        %351 = vmatprep.subr.mxu0 0.0
        %352 = vmatpush1.msra.mxu0 0.0
        %353 = vmatprep.subr.mxu0 0.0
        %354 = vmatpush1.msra.mxu0 0.0
        %355 = vmatprep.subr.mxu0 0.0
        %356 = vmatpush1.msra.mxu0 0.0
        %357 = vmatprep.subr.mxu0 0.0
        %358 = vmatpush1.msra.mxu0 0.0
        %359 = vmatprep.subr.mxu0 0.0
        %360 = vmatpush1.msra.mxu0 0.0
        %361 = vmatprep.subr.mxu0 0.0
        %362 = vmatpush1.msra.mxu0 0.0
        %363 = vmatprep.subr.mxu0 0.0
        %364 = vmatpush1.msra.mxu0 0.0
        %365 = vmatprep.subr.mxu0 0.0
        %366 = vmatpush1.msra.mxu0 0.0
        %367 = vmatprep.subr.mxu0 %v308
        %368 = vmatpush1.msra.mxu0 %v307
        %369 = vmatprep.subr.mxu0 %v306
        %370 = vmatpush1.msra.mxu0 %v305
        %371 = vmatprep.subr.mxu0 0.0
        %372 = vmatpush2.msra.mxu0 0.0
        %373 = vmatprep.subr.mxu0 0.0
        %374 = vmatpush2.msra.mxu0 0.0
        %375 = vmatprep.subr.mxu0 0.0
        %376 = vmatpush2.msra.mxu0 0.0
        %377 = vmatprep.subr.mxu0 0.0
        %378 = vmatpush2.msra.mxu0 0.0
        %379 = vmatprep.subr.mxu0 0.0
        %380 = vmatpush2.msra.mxu0 0.0
        %381 = vmatprep.subr.mxu0 0.0
        %382 = vmatpush2.msra.mxu0 0.0
        %383 = vmatprep.subr.mxu0 0.0
        %384 = vmatpush2.msra.mxu0 0.0
        %385 = vmatprep.subr.mxu0 0.0
        %386 = vmatpush2.msra.mxu0 0.0
        %387 = vmatprep.subr.mxu0 0.0
        %388 = vmatpush2.msra.mxu0 0.0
        %389 = vmatprep.subr.mxu0 0.0
        %390 = vmatpush2.msra.mxu0 0.0
        %391 = vmatprep.subr.mxu0 0.0
        %392 = vmatpush2.msra.mxu0 0.0
        %393 = vmatprep.subr.mxu0 0.0
        %394 = vmatpush2.msra.mxu0 0.0
        %395 = vmatprep.subr.mxu0 0.0
        %396 = vmatpush2.msra.mxu0 0.0
        %397 = vmatprep.subr.mxu0 0.0
        %398 = vmatpush2.msra.mxu0 0.0
        %399 = vmatprep.subr.mxu0 0.0
        %400 = vmatpush2.msra.mxu0 0.0
        %401 = vmatprep.subr.mxu0 0.0
        %402 = vmatpush2.msra.mxu0 0.0
        %403 = vmatprep.mubr.f32.mxu0 0.0
        %404 = vmatmul.mubr.f32.gmra.mxu0 %v334
        %v405 = vpop.f32.mrf.mxu0
        %v406 = vadd.f32 0.0, %v405
        %v407 = vpop.f32.mrf.mxu0
        %v408 = vadd.f32 0.0, %v407
        %409 = vmatprep.mubr.f32.mxu0 0.0
        %410 = vmatmul.mubr.f32.gmra.mxu0 %v337
        %v411 = vpop.f32.mrf.mxu0
        %v412 = vadd.f32 0.0, %v411
        %v413 = vpop.f32.mrf.mxu0
        %v414 = vadd.f32 0.0, %v413
        %415 = vdwg.mxu0
        %v417 = vsel %vm332, %v328, 0
        %v420 = vsel %vm332, %v329, 0
        %422 = vmatprep.subr.mxu0 0.0
        %423 = vmatpush1.msra.mxu0 0.0
        %424 = vmatprep.subr.mxu0 0.0
        %425 = vmatpush1.msra.mxu0 0.0
        %426 = vmatprep.subr.mxu0 0.0
        %427 = vmatpush1.msra.mxu0 0.0
        %428 = vmatprep.subr.mxu0 0.0
        %429 = vmatpush1.msra.mxu0 0.0
        %430 = vmatprep.subr.mxu0 0.0
        %431 = vmatpush1.msra.mxu0 0.0
        %432 = vmatprep.subr.mxu0 0.0
        %433 = vmatpush1.msra.mxu0 0.0
        %434 = vmatprep.subr.mxu0 0.0
        %435 = vmatpush1.msra.mxu0 0.0
        %436 = vmatprep.subr.mxu0 0.0
        %437 = vmatpush1.msra.mxu0 0.0
        %438 = vmatprep.subr.mxu0 0.0
        %439 = vmatpush1.msra.mxu0 0.0
        %440 = vmatprep.subr.mxu0 0.0
        %441 = vmatpush1.msra.mxu0 0.0
        %442 = vmatprep.subr.mxu0 0.0
        %443 = vmatpush1.msra.mxu0 0.0
        %444 = vmatprep.subr.mxu0 0.0
        %445 = vmatpush1.msra.mxu0 0.0
        %446 = vmatprep.subr.mxu0 0.0
        %447 = vmatpush1.msra.mxu0 0.0
        %448 = vmatprep.subr.mxu0 0.0
        %449 = vmatpush1.msra.mxu0 0.0
        %450 = vmatprep.subr.mxu0 %v289
        %451 = vmatpush1.msra.mxu0 %v288
        %452 = vmatprep.subr.mxu0 %v287
        %453 = vmatpush1.msra.mxu0 %v286
        %454 = vmatprep.subr.mxu0 0.0
        %455 = vmatpush2.msra.mxu0 0.0
        %456 = vmatprep.subr.mxu0 0.0
        %457 = vmatpush2.msra.mxu0 0.0
        %458 = vmatprep.subr.mxu0 0.0
        %459 = vmatpush2.msra.mxu0 0.0
        %460 = vmatprep.subr.mxu0 0.0
        %461 = vmatpush2.msra.mxu0 0.0
        %462 = vmatprep.subr.mxu0 0.0
        %463 = vmatpush2.msra.mxu0 0.0
        %464 = vmatprep.subr.mxu0 0.0
        %465 = vmatpush2.msra.mxu0 0.0
        %466 = vmatprep.subr.mxu0 0.0
        %467 = vmatpush2.msra.mxu0 0.0
        %468 = vmatprep.subr.mxu0 0.0
        %469 = vmatpush2.msra.mxu0 0.0
        %470 = vmatprep.subr.mxu0 0.0
        %471 = vmatpush2.msra.mxu0 0.0
        %472 = vmatprep.subr.mxu0 0.0
        %473 = vmatpush2.msra.mxu0 0.0
        %474 = vmatprep.subr.mxu0 0.0
        %475 = vmatpush2.msra.mxu0 0.0
        %476 = vmatprep.subr.mxu0 0.0
        %477 = vmatpush2.msra.mxu0 0.0
        %478 = vmatprep.subr.mxu0 0.0
        %479 = vmatpush2.msra.mxu0 0.0
        %480 = vmatprep.subr.mxu0 0.0
        %481 = vmatpush2.msra.mxu0 0.0
        %482 = vmatprep.subr.mxu0 0.0
        %483 = vmatpush2.msra.mxu0 0.0
        %484 = vmatprep.subr.mxu0 0.0
        %485 = vmatpush2.msra.mxu0 0.0
        %486 = vmatprep.mubr.f32.mxu0 0.0
        %487 = vmatmul.mubr.f32.gmra.mxu0 %v417
        %v488 = vpop.f32.mrf.mxu0
        %v489 = vadd.f32 %v406, %v488
        %v490 = vpop.f32.mrf.mxu0
        %v491 = vadd.f32 %v408, %v490
        %492 = vmatprep.mubr.f32.mxu0 0.0
        %493 = vmatmul.mubr.f32.gmra.mxu0 %v420
        %v494 = vpop.f32.mrf.mxu0
        %v495 = vadd.f32 %v412, %v494
        %v496 = vpop.f32.mrf.mxu0
        %v497 = vadd.f32 %v414, %v496
        %498 = vdwg.mxu0
        %v499 = vld [vmem:[%s3] sm:$0xff]
        %v500 = vld [vmem:[%s3 + $0x8] sm:$0xff]
        %v502 = vsel %vm332, %v499, 0
        %v505 = vsel %vm332, %v500, 0
        %507 = vmatprep.subr.mxu0 0.0
        %508 = vmatpush1.msra.mxu0 0.0
        %509 = vmatprep.subr.mxu0 0.0
        %510 = vmatpush1.msra.mxu0 0.0
        %511 = vmatprep.subr.mxu0 0.0
        %512 = vmatpush1.msra.mxu0 0.0
        %513 = vmatprep.subr.mxu0 0.0
        %514 = vmatpush1.msra.mxu0 0.0
        %515 = vmatprep.subr.mxu0 0.0
        %516 = vmatpush1.msra.mxu0 0.0
        %517 = vmatprep.subr.mxu0 0.0
        %518 = vmatpush1.msra.mxu0 0.0
        %519 = vmatprep.subr.mxu0 0.0
        %520 = vmatpush1.msra.mxu0 0.0
        %521 = vmatprep.subr.mxu0 0.0
        %522 = vmatpush1.msra.mxu0 0.0
        %523 = vmatprep.subr.mxu0 0.0
        %524 = vmatpush1.msra.mxu0 0.0
        %525 = vmatprep.subr.mxu0 0.0
        %526 = vmatpush1.msra.mxu0 0.0
        %527 = vmatprep.subr.mxu0 0.0
        %528 = vmatpush1.msra.mxu0 0.0
        %529 = vmatprep.subr.mxu0 0.0
        %530 = vmatpush1.msra.mxu0 0.0
        %531 = vmatprep.subr.mxu0 0.0
        %532 = vmatpush1.msra.mxu0 0.0
        %533 = vmatprep.subr.mxu0 0.0
        %534 = vmatpush1.msra.mxu0 0.0
        %535 = vmatprep.subr.mxu0 %v327
        %536 = vmatpush1.msra.mxu0 %v326
        %537 = vmatprep.subr.mxu0 %v325
        %538 = vmatpush1.msra.mxu0 %v324
        %539 = vmatprep.subr.mxu0 0.0
        %540 = vmatpush2.msra.mxu0 0.0
        %541 = vmatprep.subr.mxu0 0.0
        %542 = vmatpush2.msra.mxu0 0.0
        %543 = vmatprep.subr.mxu0 0.0
        %544 = vmatpush2.msra.mxu0 0.0
        %545 = vmatprep.subr.mxu0 0.0
        %546 = vmatpush2.msra.mxu0 0.0
        %547 = vmatprep.subr.mxu0 0.0
        %548 = vmatpush2.msra.mxu0 0.0
        %549 = vmatprep.subr.mxu0 0.0
        %550 = vmatpush2.msra.mxu0 0.0
        %551 = vmatprep.subr.mxu0 0.0
        %552 = vmatpush2.msra.mxu0 0.0
        %553 = vmatprep.subr.mxu0 0.0
        %554 = vmatpush2.msra.mxu0 0.0
        %555 = vmatprep.subr.mxu0 0.0
        %556 = vmatpush2.msra.mxu0 0.0
        %557 = vmatprep.subr.mxu0 0.0
        %558 = vmatpush2.msra.mxu0 0.0
        %559 = vmatprep.subr.mxu0 0.0
        %560 = vmatpush2.msra.mxu0 0.0
        %561 = vmatprep.subr.mxu0 0.0
        %562 = vmatpush2.msra.mxu0 0.0
        %563 = vmatprep.subr.mxu0 0.0
        %564 = vmatpush2.msra.mxu0 0.0
        %565 = vmatprep.subr.mxu0 0.0
        %566 = vmatpush2.msra.mxu0 0.0
        %567 = vmatprep.subr.mxu0 0.0
        %568 = vmatpush2.msra.mxu0 0.0
        %569 = vmatprep.subr.mxu0 0.0
        %570 = vmatpush2.msra.mxu0 0.0
        %571 = vmatprep.mubr.f32.mxu0 0.0
        %572 = vmatmul.mubr.f32.gmra.mxu0 %v502
        %v573 = vpop.f32.mrf.mxu0
        %v574 = vadd.f32 0.0, %v573
        %v575 = vpop.f32.mrf.mxu0
        %v576 = vadd.f32 0.0, %v575
        %577 = vmatprep.mubr.f32.mxu0 0.0
        %578 = vmatmul.mubr.f32.gmra.mxu0 %v505
        %v579 = vpop.f32.mrf.mxu0
        %v580 = vadd.f32 0.0, %v579
        %v581 = vpop.f32.mrf.mxu0
        %v582 = vadd.f32 0.0, %v581
        %583 = vdwg.mxu0
        %v584 = vadd.f32 %v489, %v574
        %v585 = vadd.f32 %v491, %v576
        %v586 = vadd.f32 %v495, %v580
        %v587 = vadd.f32 %v497, %v582
        %v588 = vld [vmem:[%s4] sm:$0xff]
        %v589 = vld [vmem:[%s4 + $0x8] sm:$0xff]
        %591 = vset.pattern.permute.xlu0 0
        %592 = vperm.xlu0 %591, %v588
        %v593 = vpop.permute.xlu0 %592
        %596 = vset.pattern.permute.xlu0 0
        %597 = vperm.xlu0 %596, %v589
        %v598 = vpop.permute.xlu0 %597
        %v600 = vadd.f32 %v584, %v593
        %v601 = vadd.f32 %v585, %v593
        %v602 = vadd.f32 %v586, %v598
        %v603 = vadd.f32 %v587, %v598
        %v604 = vmul.f32 %v600, 0.01
        %v605 = vmul.f32 %v601, 0.01
        %v606 = vmul.f32 %v602, 0.01
        %v607 = vmul.f32 %v603, 0.01
        %v608 = vmax.f32 %v600, %v604
        %v609 = vmax.f32 %v601, %v605
        %v610 = vmax.f32 %v602, %v606
        %v611 = vmax.f32 %v603, %v607
        %v612 = vld [vmem:[%s5] sm:$0xff]
        %v613 = vld [vmem:[%s5 + $0x8] sm:$0xff]
        %v614 = vld [vmem:[%s6] sm:$0xff]
        %v615 = vld [vmem:[%s6 + $0x8] sm:$0xff]
        %617 = vset.pattern.permute.xlu0 0
        %618 = vperm.xlu0 %617, %v614
        %v619 = vpop.permute.xlu0 %618
        %622 = vset.pattern.permute.xlu0 0
        %623 = vperm.xlu0 %622, %v615
        %v624 = vpop.permute.xlu0 %623
        %v627 = vsel %vm332, %v612, 0
        %v630 = vsel %vm332, %v613, 0
        %632 = vmatprep.subr.mxu0 0.0
        %633 = vmatpush1.msra.mxu0 0.0
        %634 = vmatprep.subr.mxu0 0.0
        %635 = vmatpush1.msra.mxu0 0.0
        %636 = vmatprep.subr.mxu0 0.0
        %637 = vmatpush1.msra.mxu0 0.0
        %638 = vmatprep.subr.mxu0 0.0
        %639 = vmatpush1.msra.mxu0 0.0
        %640 = vmatprep.subr.mxu0 0.0
        %641 = vmatpush1.msra.mxu0 0.0
        %642 = vmatprep.subr.mxu0 0.0
        %643 = vmatpush1.msra.mxu0 0.0
        %644 = vmatprep.subr.mxu0 0.0
        %645 = vmatpush1.msra.mxu0 0.0
        %646 = vmatprep.subr.mxu0 0.0
        %647 = vmatpush1.msra.mxu0 0.0
        %648 = vmatprep.subr.mxu0 0.0
        %649 = vmatpush1.msra.mxu0 0.0
        %650 = vmatprep.subr.mxu0 0.0
        %651 = vmatpush1.msra.mxu0 0.0
        %652 = vmatprep.subr.mxu0 0.0
        %653 = vmatpush1.msra.mxu0 0.0
        %654 = vmatprep.subr.mxu0 0.0
        %655 = vmatpush1.msra.mxu0 0.0
        %656 = vmatprep.subr.mxu0 0.0
        %657 = vmatpush1.msra.mxu0 0.0
        %658 = vmatprep.subr.mxu0 0.0
        %659 = vmatpush1.msra.mxu0 0.0
        %660 = vmatprep.subr.mxu0 %v611
        %661 = vmatpush1.msra.mxu0 %v610
        %662 = vmatprep.subr.mxu0 %v609
        %663 = vmatpush1.msra.mxu0 %v608
        %664 = vmatprep.subr.mxu0 0.0
        %665 = vmatpush2.msra.mxu0 0.0
        %666 = vmatprep.subr.mxu0 0.0
        %667 = vmatpush2.msra.mxu0 0.0
        %668 = vmatprep.subr.mxu0 0.0
        %669 = vmatpush2.msra.mxu0 0.0
        %670 = vmatprep.subr.mxu0 0.0
        %671 = vmatpush2.msra.mxu0 0.0
        %672 = vmatprep.subr.mxu0 0.0
        %673 = vmatpush2.msra.mxu0 0.0
        %674 = vmatprep.subr.mxu0 0.0
        %675 = vmatpush2.msra.mxu0 0.0
        %676 = vmatprep.subr.mxu0 0.0
        %677 = vmatpush2.msra.mxu0 0.0
        %678 = vmatprep.subr.mxu0 0.0
        %679 = vmatpush2.msra.mxu0 0.0
        %680 = vmatprep.subr.mxu0 0.0
        %681 = vmatpush2.msra.mxu0 0.0
        %682 = vmatprep.subr.mxu0 0.0
        %683 = vmatpush2.msra.mxu0 0.0
        %684 = vmatprep.subr.mxu0 0.0
        %685 = vmatpush2.msra.mxu0 0.0
        %686 = vmatprep.subr.mxu0 0.0
        %687 = vmatpush2.msra.mxu0 0.0
        %688 = vmatprep.subr.mxu0 0.0
        %689 = vmatpush2.msra.mxu0 0.0
        %690 = vmatprep.subr.mxu0 0.0
        %691 = vmatpush2.msra.mxu0 0.0
        %692 = vmatprep.subr.mxu0 0.0
        %693 = vmatpush2.msra.mxu0 0.0
        %694 = vmatprep.subr.mxu0 0.0
        %695 = vmatpush2.msra.mxu0 0.0
        %696 = vmatprep.mubr.f32.mxu0 0.0
        %697 = vmatmul.mubr.f32.gmra.mxu0 %v627
        %v698 = vpop.f32.mrf.mxu0
        %v699 = vadd.f32 %v619, %v698
        %v700 = vpop.f32.mrf.mxu0
        %v701 = vadd.f32 %v619, %v700
        %702 = vmatprep.mubr.f32.mxu0 0.0
        %703 = vmatmul.mubr.f32.gmra.mxu0 %v630
        %v704 = vpop.f32.mrf.mxu0
        %v705 = vadd.f32 %v624, %v704
        %v706 = vpop.f32.mrf.mxu0
        %v707 = vadd.f32 %v624, %v706
        %708 = vdwg.mxu0
        %v709 = vadd.f32 %v286, %v699
        %v710 = vadd.f32 %v287, %v701
        %v711 = vadd.f32 %v288, %v705
        %v712 = vadd.f32 %v289, %v707
        %713 = vst [vmem:[%s271] sm:$0xff] %v709
        %714 = vst [vmem:[%s271 + $0x8] sm:$0xff] %v710
        %715 = vst [vmem:[%s271 + $0x10] sm:$0xff] %v711
        %716 = vst [vmem:[%s271 + $0x18] sm:$0xff] %v712
        %s717 = sand.u32 %s181, 1
        %s718 = scalar_lea.sflag [#allocation3], %s717
        %s719 = sand.u32 %s181, 1
        %s720 = smul.addr %s719, 32
        %s721 = scalar_lea.vmem [#allocation2], %s720
        // Predicated region
        $region49: #{dilated_residual_layer.1} parent=47 // pred_check
          %p722 = pneg %p191
        $region50: #{dilated_residual_layer.1} parent=47 // pred_check_branch
          %724 = sbr.rel (%p722) target = $region52
        $region51: #{dilated_residual_layer.1} parent=47 // pred_region
          %s726 = ssub.s32 512, 512
          %727 = vsyncadd %s718, %s726
          %s728 = smul.addr %s21, 4
          %s729 = smul.addr %s728, 128
          %s730 = scalar_lea.hbm %s7, %s729
          %s731 = sshll.u32 %s721, 4
          %s732 = int_to_ptr.vmem [resolvable:$true] %s731
          %737 = dma.vmem_to_hbm [thread:$0]  %s732, 512, %s730, %s718, 256, 256, 16
        $region52: #{dilated_residual_layer.1} parent=47 // pred_fallthru
          _
      $region48: #{dilated_residual_layer.1} parent=5 // pred_fallthru
        _
      %p738 = scmp.le.s32.totalorder 2, %s16
      // Predicated region
      $region53: #{dilated_residual_layer.1} parent=5 // pred_check
        %p739 = pneg %p738
      $region54: #{dilated_residual_layer.1} parent=5 // pred_check_branch
        %741 = sbr.rel (%p739) target = $region56
      $region55: #{dilated_residual_layer.1} parent=5 // pred_region
        %s742 = ssub.s32 %s16, 2
        // Predicated region
        $region57: #{dilated_residual_layer.1} parent=55 // pred_check
          %p743 = pneg %p197
        $region58: #{dilated_residual_layer.1} parent=55 // pred_check_branch
          %745 = sbr.rel (%p743) target = $region60
        $region59: #{dilated_residual_layer.1} parent=55 // pred_region
          %s746 = sand.u32 %s182, 1
          %s747 = scalar_lea.sflag [#allocation3], %s746
          %s748 = sand.u32 %s182, 1
          %s749 = smul.addr %s748, 32
          %s750 = scalar_lea.vmem [#allocation2], %s749
          %751 = dma.done %s747, 512
        $region60: #{dilated_residual_layer.1} parent=55 // pred_fallthru
          _
      $region56: #{dilated_residual_layer.1} parent=5 // pred_fallthru
        _
    $region6: #{dilated_residual_layer.1} parent=1 // loop_footer
      %s20 = sadd.s32 1, %s16
    $region7: #{dilated_residual_layer.1} parent=1 // loop_footer_branch
      %15 = sbr.rel target = $region3
    $region8: #{dilated_residual_layer.1} parent=1 // loop_exit
      _
    %752 = vsyncpa [#allocation3], 1
    %s753 = scalar_lea.sflag [#allocation3], 1
    %754 = vsyncpa %s753, 1

</llo_original>
